<compile_context>
chip_gen: v6e
topology: v6e:2x2x1
jax: 0.10.0
libtpu: 0.0.40
codegen_flags: <defaults>
</compile_context>

<pallas_src>
import functools

import numpy as np
import jax
import jax.numpy as jnp
from jax.experimental import pallas as pl
from jax.experimental.pallas import tpu as pltpu


def _round_up(x, m):
    return (x + m - 1) // m * m


def _convtr_kernel(*refs, kernel_size, stride, cpad, tile_t, halo, halo_pad):
    # refs: x_cur, [x_prev], weight, bias, out, acc_scratch
    if halo > 0:
        x_ref, xp_ref, w_ref, b_ref, o_ref, acc_ref = refs
    else:
        x_ref, w_ref, b_ref, o_ref, acc_ref = refs
        xp_ref = None

    i = pl.program_id(1)          # time-tile index
    bias = b_ref[...]             # (1, cpad) f32

    # Polyphase gather: out[t, r] = bias + sum_q W[q*stride+r]^T x[t - q]
    for r in range(stride):
        wrote = False
        q, k = 0, r
        while k < kernel_size:
            w_k = w_ref[k]        # (Cin, cpad)
            if q == 0:
                # init accumulator with bias folded in (single pass)
                acc_ref[...] = bias + jnp.dot(
                    x_ref[...], w_k, preferred_element_type=jnp.float32)
            else:
                # contribution from the current tile: output rows [q, tile_t)
                part = jnp.dot(x_ref[pl.ds(0, tile_t - q), :], w_k,
                               preferred_element_type=jnp.float32)
                acc_ref[pl.ds(q, tile_t - q), :] += part

                # contribution from the previous tile's halo rows: output rows [0, q)
                @pl.when(i > 0)
                def _(q=q, w_k=w_k):
                    prev = jnp.dot(xp_ref[pl.ds(halo_pad - q, q), :], w_k,
                                   preferred_element_type=jnp.float32)
                    acc_ref[pl.ds(0, q), :] += prev
            wrote = True
            q += 1
            k += stride

        if not wrote:             # phase with no taps (only possible when K < stride)
            acc_ref[...] = jnp.broadcast_to(bias, (tile_t, cpad))

        # one lane-dense (128-aligned) store per phase, bf16
        o_ref[:, r * cpad:(r + 1) * cpad] = acc_ref[...].astype(o_ref.dtype)


def _reparametrize_weight(weight, norm, weight_g=None):
    """weight_norm (dim=0): w = g * v / ||v||, norm over all dims except dim 0.

    Parameter-only: hoist out of any streaming decode loop.
    """
    if norm == "weight_norm":
        v = weight
        vnorm = jnp.sqrt(jnp.sum(v * v, axis=(1, 2), keepdims=True))
        g = vnorm if weight_g is None else weight_g.reshape(-1, 1, 1).astype(jnp.float32)
        weight = g * v / vnorm
    return weight


def norm_conv_transpose_1d(x_ncl, weight, bias, *, stride, norm="none", weight_g=None,
                           padding=0, output_padding=0, dilation=1, groups=1,
                           compute_dtype=jnp.bfloat16, tile_t=None):
    """Forward of NormConvTranspose1d.

    x_ncl:  (B, Cin, T) float32 (PyTorch NCL layout)
    weight: (Cin, Cout, K) raw weight (the `v` tensor when norm == 'weight_norm')
    bias:   (Cout,)
    returns (B, Cout, L_out), L_out = (T - 1) * stride + K.
    """
    assert norm in ("none", "weight_norm")
    if not (padding == 0 and output_padding == 0 and dilation == 1 and groups == 1):
        # RawStreamingConvTranspose1d asserts exactly these constraints.
        raise NotImplementedError("only padding=0, output_padding=0, dilation=1, groups=1")

    weight = _reparametrize_weight(weight.astype(jnp.float32), norm, weight_g)

    B, Cin, T = x_ncl.shape
    Cin_w, Cout, K = weight.shape
    assert Cin_w == Cin
    L = (T - 1) * stride + K
    halo = (K - 1) // stride                  # input rows needed from the previous tile
    cpad = _round_up(Cout, 128)               # lane-dense output channels
    # Pad Cin to a lane multiple only when it is already large (otherwise the op is
    # output-writeback bound and padding just inflates the x read).
    cin_used = _round_up(Cin, 128) if Cin >= 128 else Cin

    if halo > 0:
        halo_pad = _round_up(halo, 16)        # halo block rows (bf16 sublane packing)
        align = halo_pad
    else:
        halo_pad = 0
        align = 16

    # --- VMEM budget / tile size (per generation, not hard-coded for v7x) -------------
    try:
        vmem_cap = int(getattr(pltpu.get_tpu_info(), "vmem_capacity_bytes",
                               64 * 1024 * 1024))
    except Exception:  # not on TPU / interpret mode
        vmem_cap = 64 * 1024 * 1024
    vmem_limit = max(32 * 1024 * 1024,
                     min(vmem_cap - 16 * 1024 * 1024, 100 * 1024 * 1024))

    io_bytes = jnp.dtype(compute_dtype).itemsize
    per_t = (2 * stride * cpad * io_bytes     # double-buffered output tile
             + cpad * 4                       # f32 accumulator scratch
             + 2 * cin_used * io_bytes        # double-buffered x tile
             + 2 * cpad * 4)                  # headroom for dot/broadcast temporaries
    fixed = (2 * K * cin_used * cpad * io_bytes   # double-buffered resident weight
             + 2 * halo_pad * cin_used * io_bytes # double-buffered halo block
             + 512 * 1024)                        # bias, semaphores, slack
    # TODO(synk): single-buffer the constant-index weight/bias blocks (pipeline_mode=
    # pl.Buffered(1)) to reclaim the redundant weight buffer on v7x once that path is stable.
    if tile_t is None:
        budget = max(int((vmem_limit - fixed) * 0.7), per_t * align)
        tile_t = min(budget // per_t, 2048)
    tile_t = max(align, tile_t // align * align)
    cap = max(_round_up(T + halo, align), align)
    tile_t = min(tile_t, cap)
    if halo >= tile_t:
        tile_t = _round_up(halo + 1, align)
    num_tiles = -(-(T + halo) // tile_t)
    t_pad = num_tiles * tile_t

    # Layout plumbing (weight/bias parts are parameter-only and hoistable across streaming calls).
    x_nlc = jnp.transpose(x_ncl, (0, 2, 1)).astype(compute_dtype)
    x_nlc = jnp.pad(x_nlc, ((0, 0), (0, t_pad - T), (0, cin_used - Cin)))
    w3 = jnp.transpose(weight, (2, 0, 1))                         # (K, Cin, Cout)
    w3 = jnp.pad(w3, ((0, 0), (0, cin_used - Cin), (0, cpad - Cout))).astype(compute_dtype)
    b2 = jnp.pad(bias.astype(jnp.float32).reshape(1, Cout), ((0, 0), (0, cpad - Cout)))

    kern = functools.partial(_convtr_kernel, kernel_size=K, stride=stride,
                             cpad=cpad, tile_t=tile_t, halo=halo, halo_pad=halo_pad)

    in_specs = [pl.BlockSpec((None, tile_t, cin_used), lambda b, i: (b, i, 0))]
    operands = [x_nlc]
    if halo > 0:
        ratio = tile_t // halo_pad
        in_specs.append(pl.BlockSpec(
            (None, halo_pad, cin_used),
            lambda b, i: (b, jnp.maximum(i * ratio - 1, 0), 0)))   # rows just before this tile
        operands.append(x_nlc)
    in_specs += [
        pl.BlockSpec((K, cin_used, cpad), lambda b, i: (0, 0, 0)),
        pl.BlockSpec((1, cpad), lambda b, i: (0, 0)),
    ]
    operands += [w3, b2]

    out = pl.pallas_call(
        kern,
        out_shape=jax.ShapeDtypeStruct((B, t_pad, stride * cpad), compute_dtype),
        grid_spec=pltpu.PrefetchScalarGridSpec(
            num_scalar_prefetch=0,
            grid=(B, num_tiles),
            in_specs=in_specs,
            out_specs=pl.BlockSpec((None, tile_t, stride * cpad),
                                   lambda b, i: (b, i, 0)),
            scratch_shapes=[pltpu.VMEM((tile_t, cpad), jnp.float32)],
        ),
        compiler_params=pltpu.CompilerParams(
            dimension_semantics=("parallel", "parallel"),
            vmem_limit_bytes=vmem_limit,
        ),
    )(*operands)

    # (B, t_pad, stride*cpad) --free reshape--> (B, t_pad*stride, cpad) -> trim -> NCL
    y = out.reshape(B, t_pad * stride, cpad)[:, :L, :Cout]
    return jnp.transpose(y, (0, 2, 1)).astype(jnp.float32)


def _reference(x_ncl, weight, bias, stride):
    """Pure numpy reference for ConvTranspose1d (padding=0, dilation=1, groups=1)."""
    B, Cin, T = x_ncl.shape
    _, Cout, K = weight.shape
    L = (T - 1) * stride + K
    y = np.zeros((B, Cout, L), np.float32)
    for b in range(B):
        for t in range(T):
            for k in range(K):
                y[b, :, t * stride + k] += weight[:, :, k].T @ x_ncl[b, :, t]
    y += bias[None, :, None]
    return y


if __name__ == "__main__":
    B, Cin, Cout, K, STRIDE, T = 2, 8, 16, 4, 2, 16

    key = jax.random.PRNGKey(0)
    kx, kw, kb = jax.random.split(key, 3)
    x = jax.random.normal(kx, (B, Cin, T), jnp.float32)
    w = jax.random.normal(kw, (Cin, Cout, K), jnp.float32) * 0.1
    b = jax.random.normal(kb, (Cout,), jnp.float32) * 0.1

    # Default tiling (single time tile) and a forced multi-tile run that exercises the
    # cross-tile halo path (previous-tile block + pl.when gating).
    y1 = jax.block_until_ready(
        norm_conv_transpose_1d(x, w, b, stride=STRIDE, norm="weight_norm"))
    y2 = jax.block_until_ready(
        norm_conv_transpose_1d(x, w, b, stride=STRIDE, norm="weight_norm", tile_t=16))

    # Reference fed the same bf16-rounded operands the kernel's MXU consumes
    # (f32 accumulation in both paths; kernel output is stored in bf16, hence the tolerance).
    w_rep = _reparametrize_weight(w.astype(jnp.float32), "weight_norm")
    w_used = np.asarray(w_rep.astype(jnp.bfloat16).astype(jnp.float32))
    x_used = np.asarray(x.astype(jnp.bfloat16).astype(jnp.float32))
    y_ref = _reference(x_used, w_used, np.asarray(b), STRIDE)

    L = (T - 1) * STRIDE + K
    assert y1.shape == (B, Cout, L), y1.shape
    assert y2.shape == (B, Cout, L), y2.shape
    np.testing.assert_allclose(np.asarray(y1), y_ref, rtol=2e-2, atol=2e-2)
    np.testing.assert_allclose(np.asarray(y2), y_ref, rtol=2e-2, atol=2e-2)

    print("KERNEL_OK")
</pallas_src>

<mosaic_0001>
module attributes {stable_mosaic.version = 11 : i64} {
  func.func @_convtr_kernel(%arg0: i32, %arg1: i32, %arg2: memref<1x32x8xbf16, #tpu.memory_space<vmem>>, %arg3: memref<1x16x8xbf16, #tpu.memory_space<vmem>>, %arg4: memref<4x8x128xbf16, #tpu.memory_space<vmem>>, %arg5: memref<1x128xf32, #tpu.memory_space<vmem>>, %arg6: memref<1x32x256xbf16, #tpu.memory_space<vmem>>, %arg7: memref<32x128xf32, #tpu.memory_space<vmem>>) attributes {dimension_semantics = [#tpu.dimension_semantics<parallel>, #tpu.dimension_semantics<parallel>], iteration_bounds = array<i64: 2, 1>, scalar_prefetch = 0 : i64, scratch_operands = 1 : i64, tpu.core_type = #tpu.core_type<tc>, window_params = [{transform_indices = @transform_0, window_bounds = array<i64: 1, 32, 8>}, {transform_indices = @transform_1, window_bounds = array<i64: 1, 16, 8>}, {pipeline_mode = #tpu.pipeline_mode<synchronous>, transform_indices = @transform_2, window_bounds = array<i64: 4, 8, 128>}, {pipeline_mode = #tpu.pipeline_mode<synchronous>, transform_indices = @transform_3, window_bounds = array<i64: 1, 128>}, {transform_indices = @transform_4, window_bounds = array<i64: 1, 32, 256>}]} {
    %c0 = arith.constant 0 : index
    %c0_0 = arith.constant 0 : index
    %0 = vector.load %arg5[%c0, %c0_0] : memref<1x128xf32, #tpu.memory_space<vmem>>, vector<1x128xf32>
    %c0_1 = arith.constant 0 : index
    %c0_2 = arith.constant 0 : index
    %c0_3 = arith.constant 0 : index
    %1 = vector.load %arg4[%c0_1, %c0_2, %c0_3] : memref<4x8x128xbf16, #tpu.memory_space<vmem>>, vector<1x8x128xbf16>
    %2 = vector.shape_cast %1 : vector<1x8x128xbf16> to vector<8x128xbf16>
    %c0_4 = arith.constant 0 : index
    %c0_5 = arith.constant 0 : index
    %c0_6 = arith.constant 0 : index
    %3 = vector.load %arg2[%c0_4, %c0_5, %c0_6] : memref<1x32x8xbf16, #tpu.memory_space<vmem>>, vector<1x32x8xbf16>
    %4 = vector.shape_cast %3 : vector<1x32x8xbf16> to vector<32x8xbf16>
    %cst = arith.constant dense<0.000000e+00> : vector<32x128xf32>
    %5 = tpu.matmul %4, %2, %cst {dimension_numbers = #tpu.dot_dimension_numbers<[1], [0], [0], [1], [0, 0, 1, 1], [], []>} : vector<32x8xbf16>, vector<8x128xbf16>, vector<32x128xf32> -> vector<32x128xf32>
    %6 = vector.broadcast %0 : vector<1x128xf32> to vector<32x128xf32>
    %7 = arith.addf %6, %5 : vector<32x128xf32>
    %c0_7 = arith.constant 0 : index
    %c0_8 = arith.constant 0 : index
    %8 = vector.load %arg7[%c0_7, %c0_8] : memref<32x128xf32, #tpu.memory_space<vmem>>, vector<32x128xf32>
    tpu.vector_store %arg7[%c0_7, %c0_8], %7 {strides = array<i32>} : memref<32x128xf32, #tpu.memory_space<vmem>>, vector<32x128xf32>,
    %c2 = arith.constant 2 : index
    %c0_9 = arith.constant 0 : index
    %c0_10 = arith.constant 0 : index
    %9 = vector.load %arg4[%c2, %c0_9, %c0_10] : memref<4x8x128xbf16, #tpu.memory_space<vmem>>, vector<1x8x128xbf16>
    %10 = vector.shape_cast %9 : vector<1x8x128xbf16> to vector<8x128xbf16>
    %c0_11 = arith.constant 0 : index
    %c0_12 = arith.constant 0 : index
    %c0_13 = arith.constant 0 : index
    %11 = vector.load %arg2[%c0_11, %c0_12, %c0_13] : memref<1x32x8xbf16, #tpu.memory_space<vmem>>, vector<1x31x8xbf16>
    %12 = vector.shape_cast %11 : vector<1x31x8xbf16> to vector<31x8xbf16>
    %cst_14 = arith.constant dense<0.000000e+00> : vector<31x128xf32>
    %13 = tpu.matmul %12, %10, %cst_14 {dimension_numbers = #tpu.dot_dimension_numbers<[1], [0], [0], [1], [0, 0, 1, 1], [], []>} : vector<31x8xbf16>, vector<8x128xbf16>, vector<31x128xf32> -> vector<31x128xf32>
    %c1 = arith.constant 1 : index
    %c0_15 = arith.constant 0 : index
    %14 = vector.load %arg7[%c1, %c0_15] : memref<32x128xf32, #tpu.memory_space<vmem>>, vector<31x128xf32>
    %15 = arith.addf %14, %13 : vector<31x128xf32>
    %c1_16 = arith.constant 1 : index
    %c0_17 = arith.constant 0 : index
    %16 = vector.load %arg7[%c1_16, %c0_17] : memref<32x128xf32, #tpu.memory_space<vmem>>, vector<31x128xf32>
    tpu.vector_store %arg7[%c1_16, %c0_17], %15 {strides = array<i32>} : memref<32x128xf32, #tpu.memory_space<vmem>>, vector<31x128xf32>,
    %c0_i32 = arith.constant 0 : i32
    %17 = arith.cmpi sgt, %arg1, %c0_i32 : i32
    %18 = arith.extui %17 : i1 to i32
    %c0_i32_18 = arith.constant 0 : i32
    %19 = arith.cmpi ne, %18, %c0_i32_18 : i32
    scf.if %19 {
      %c0_49 = arith.constant 0 : index
      %c15 = arith.constant 15 : index
      %c0_50 = arith.constant 0 : index
      %49 = vector.load %arg3[%c0_49, %c15, %c0_50] : memref<1x16x8xbf16, #tpu.memory_space<vmem>>, vector<1x1x8xbf16>
      %50 = vector.shape_cast %49 : vector<1x1x8xbf16> to vector<1x8xbf16>
      %cst_51 = arith.constant dense<0.000000e+00> : vector<1x128xf32>
      %51 = tpu.matmul %50, %10, %cst_51 {dimension_numbers = #tpu.dot_dimension_numbers<[1], [0], [0], [1], [0, 0, 1, 1], [], []>} : vector<1x8xbf16>, vector<8x128xbf16>, vector<1x128xf32> -> vector<1x128xf32>
      %c0_52 = arith.constant 0 : index
      %c0_53 = arith.constant 0 : index
      %52 = vector.load %arg7[%c0_52, %c0_53] : memref<32x128xf32, #tpu.memory_space<vmem>>, vector<1x128xf32>
      %53 = arith.addf %52, %51 : vector<1x128xf32>
      %c0_54 = arith.constant 0 : index
      %c0_55 = arith.constant 0 : index
      %54 = vector.load %arg7[%c0_54, %c0_55] : memref<32x128xf32, #tpu.memory_space<vmem>>, vector<1x128xf32>
      tpu.vector_store %arg7[%c0_54, %c0_55], %53 {strides = array<i32>} : memref<32x128xf32, #tpu.memory_space<vmem>>, vector<1x128xf32>,
    } else {
    }
    %c0_19 = arith.constant 0 : index
    %c0_20 = arith.constant 0 : index
    %20 = vector.load %arg7[%c0_19, %c0_20] : memref<32x128xf32, #tpu.memory_space<vmem>>, vector<32x128xf32>
    %21 = arith.truncf %20 : vector<32x128xf32> to vector<32x128xbf16>
    %c0_21 = arith.constant 0 : index
    %c0_22 = arith.constant 0 : index
    %c0_23 = arith.constant 0 : index
    %22 = vector.load %arg6[%c0_21, %c0_22, %c0_23] : memref<1x32x256xbf16, #tpu.memory_space<vmem>>, vector<1x32x128xbf16>
    %23 = vector.shape_cast %22 : vector<1x32x128xbf16> to vector<32x128xbf16>
    %24 = vector.shape_cast %21 : vector<32x128xbf16> to vector<1x32x128xbf16>
    tpu.vector_store %arg6[%c0_21, %c0_22, %c0_23], %24 {strides = array<i32>} : memref<1x32x256xbf16, #tpu.memory_space<vmem>>, vector<1x32x128xbf16>,
    %c1_24 = arith.constant 1 : index
    %c0_25 = arith.constant 0 : index
    %c0_26 = arith.constant 0 : index
    %25 = vector.load %arg4[%c1_24, %c0_25, %c0_26] : memref<4x8x128xbf16, #tpu.memory_space<vmem>>, vector<1x8x128xbf16>
    %26 = vector.shape_cast %25 : vector<1x8x128xbf16> to vector<8x128xbf16>
    %c0_27 = arith.constant 0 : index
    %c0_28 = arith.constant 0 : index
    %c0_29 = arith.constant 0 : index
    %27 = vector.load %arg2[%c0_27, %c0_28, %c0_29] : memref<1x32x8xbf16, #tpu.memory_space<vmem>>, vector<1x32x8xbf16>
    %28 = vector.shape_cast %27 : vector<1x32x8xbf16> to vector<32x8xbf16>
    %cst_30 = arith.constant dense<0.000000e+00> : vector<32x128xf32>
    %29 = tpu.matmul %28, %26, %cst_30 {dimension_numbers = #tpu.dot_dimension_numbers<[1], [0], [0], [1], [0, 0, 1, 1], [], []>} : vector<32x8xbf16>, vector<8x128xbf16>, vector<32x128xf32> -> vector<32x128xf32>
    %30 = vector.broadcast %0 : vector<1x128xf32> to vector<32x128xf32>
    %31 = arith.addf %30, %29 : vector<32x128xf32>
    %c0_31 = arith.constant 0 : index
    %c0_32 = arith.constant 0 : index
    %32 = vector.load %arg7[%c0_31, %c0_32] : memref<32x128xf32, #tpu.memory_space<vmem>>, vector<32x128xf32>
    tpu.vector_store %arg7[%c0_31, %c0_32], %31 {strides = array<i32>} : memref<32x128xf32, #tpu.memory_space<vmem>>, vector<32x128xf32>,
    %c3 = arith.constant 3 : index
    %c0_33 = arith.constant 0 : index
    %c0_34 = arith.constant 0 : index
    %33 = vector.load %arg4[%c3, %c0_33, %c0_34] : memref<4x8x128xbf16, #tpu.memory_space<vmem>>, vector<1x8x128xbf16>
    %34 = vector.shape_cast %33 : vector<1x8x128xbf16> to vector<8x128xbf16>
    %c0_35 = arith.constant 0 : index
    %c0_36 = arith.constant 0 : index
    %c0_37 = arith.constant 0 : index
    %35 = vector.load %arg2[%c0_35, %c0_36, %c0_37] : memref<1x32x8xbf16, #tpu.memory_space<vmem>>, vector<1x31x8xbf16>
    %36 = vector.shape_cast %35 : vector<1x31x8xbf16> to vector<31x8xbf16>
    %cst_38 = arith.constant dense<0.000000e+00> : vector<31x128xf32>
    %37 = tpu.matmul %36, %34, %cst_38 {dimension_numbers = #tpu.dot_dimension_numbers<[1], [0], [0], [1], [0, 0, 1, 1], [], []>} : vector<31x8xbf16>, vector<8x128xbf16>, vector<31x128xf32> -> vector<31x128xf32>
    %c1_39 = arith.constant 1 : index
    %c0_40 = arith.constant 0 : index
    %38 = vector.load %arg7[%c1_39, %c0_40] : memref<32x128xf32, #tpu.memory_space<vmem>>, vector<31x128xf32>
    %39 = arith.addf %38, %37 : vector<31x128xf32>
    %c1_41 = arith.constant 1 : index
    %c0_42 = arith.constant 0 : index
    %40 = vector.load %arg7[%c1_41, %c0_42] : memref<32x128xf32, #tpu.memory_space<vmem>>, vector<31x128xf32>
    tpu.vector_store %arg7[%c1_41, %c0_42], %39 {strides = array<i32>} : memref<32x128xf32, #tpu.memory_space<vmem>>, vector<31x128xf32>,
    %c0_i32_43 = arith.constant 0 : i32
    %41 = arith.cmpi sgt, %arg1, %c0_i32_43 : i32
    %42 = arith.extui %41 : i1 to i32
    %c0_i32_44 = arith.constant 0 : i32
    %43 = arith.cmpi ne, %42, %c0_i32_44 : i32
    scf.if %43 {
      %c0_49 = arith.constant 0 : index
      %c15 = arith.constant 15 : index
      %c0_50 = arith.constant 0 : index
      %49 = vector.load %arg3[%c0_49, %c15, %c0_50] : memref<1x16x8xbf16, #tpu.memory_space<vmem>>, vector<1x1x8xbf16>
      %50 = vector.shape_cast %49 : vector<1x1x8xbf16> to vector<1x8xbf16>
      %cst_51 = arith.constant dense<0.000000e+00> : vector<1x128xf32>
      %51 = tpu.matmul %50, %34, %cst_51 {dimension_numbers = #tpu.dot_dimension_numbers<[1], [0], [0], [1], [0, 0, 1, 1], [], []>} : vector<1x8xbf16>, vector<8x128xbf16>, vector<1x128xf32> -> vector<1x128xf32>
      %c0_52 = arith.constant 0 : index
      %c0_53 = arith.constant 0 : index
      %52 = vector.load %arg7[%c0_52, %c0_53] : memref<32x128xf32, #tpu.memory_space<vmem>>, vector<1x128xf32>
      %53 = arith.addf %52, %51 : vector<1x128xf32>
      %c0_54 = arith.constant 0 : index
      %c0_55 = arith.constant 0 : index
      %54 = vector.load %arg7[%c0_54, %c0_55] : memref<32x128xf32, #tpu.memory_space<vmem>>, vector<1x128xf32>
      tpu.vector_store %arg7[%c0_54, %c0_55], %53 {strides = array<i32>} : memref<32x128xf32, #tpu.memory_space<vmem>>, vector<1x128xf32>,
    } else {
    }
    %c0_45 = arith.constant 0 : index
    %c0_46 = arith.constant 0 : index
    %44 = vector.load %arg7[%c0_45, %c0_46] : memref<32x128xf32, #tpu.memory_space<vmem>>, vector<32x128xf32>
    %45 = arith.truncf %44 : vector<32x128xf32> to vector<32x128xbf16>
    %c0_47 = arith.constant 0 : index
    %c0_48 = arith.constant 0 : index
    %c128 = arith.constant 128 : index
    %46 = vector.load %arg6[%c0_47, %c0_48, %c128] : memref<1x32x256xbf16, #tpu.memory_space<vmem>>, vector<1x32x128xbf16>
    %47 = vector.shape_cast %46 : vector<1x32x128xbf16> to vector<32x128xbf16>
    %48 = vector.shape_cast %45 : vector<32x128xbf16> to vector<1x32x128xbf16>
    tpu.vector_store %arg6[%c0_47, %c0_48, %c128], %48 {strides = array<i32>} : memref<1x32x256xbf16, #tpu.memory_space<vmem>>, vector<1x32x128xbf16>,
    return
  }
  func.func @transform_0(%arg0: i32, %arg1: i32) -> (i32, i32, i32) {
    %c0_i32 = arith.constant 0 : i32
    %c0_i32_0 = arith.constant 0 : i32
    return %arg0, %arg1, %c0_i32 : i32, i32, i32
  }
  func.func @transform_1(%arg0: i32, %arg1: i32) -> (i32, i32, i32) {
    %c2_i32 = arith.constant 2 : i32
    %0 = arith.muli %arg1, %c2_i32 : i32
    %c1_i32 = arith.constant 1 : i32
    %1 = arith.subi %0, %c1_i32 : i32
    %c0_i32 = arith.constant 0 : i32
    %2 = arith.maxsi %1, %c0_i32 : i32
    %c0_i32_0 = arith.constant 0 : i32
    %c0_i32_1 = arith.constant 0 : i32
    return %arg0, %2, %c0_i32_0 : i32, i32, i32
  }
  func.func @transform_2(%arg0: i32, %arg1: i32) -> (i32, i32, i32) {
    %c0_i32 = arith.constant 0 : i32
    %c0_i32_0 = arith.constant 0 : i32
    %c0_i32_1 = arith.constant 0 : i32
    %c0_i32_2 = arith.constant 0 : i32
    return %c0_i32, %c0_i32_0, %c0_i32_1 : i32, i32, i32
  }
  func.func @transform_3(%arg0: i32, %arg1: i32) -> (i32, i32) {
    %c0_i32 = arith.constant 0 : i32
    %c0_i32_0 = arith.constant 0 : i32
    %c0_i32_1 = arith.constant 0 : i32
    return %c0_i32, %c0_i32_0 : i32, i32
  }
  func.func @transform_4(%arg0: i32, %arg1: i32) -> (i32, i32, i32) {
    %c0_i32 = arith.constant 0 : i32
    %c0_i32_0 = arith.constant 0 : i32
    return %arg0, %arg1, %c0_i32 : i32, i32, i32
  }
}

</mosaic_0001>

<llo_original>
// kernel: tpu_custom_call.1
$region0: #{tpu_custom_call.1}
  #allocation0 [shape = 'u32[]', space=smem, size = 0x4, offset = 0x4, fixed_abs, tag = 'smem constant byte address 0x4 - core index']
  #allocation1 [shape = 'u32[144,128]{1,0:T(1,128)}', space=vmem, size = 0x12000, scoped, tag = 'internal scratch']
  #allocation2 [shape = 'f32[32,128]{1,0:T(8,128)}', space=vmem, size = 0x4000, scoped, tag = 'scratch operand']
  %s0 = inlined_call_operand.vmem [shape: bf16[2,32,8], index: 0, kind: input, shape index: {}]
  %s1 = inlined_call_operand.vmem [shape: bf16[2,32,8], index: 1, kind: input, shape index: {}]
  %s2 = inlined_call_operand.vmem [shape: bf16[4,8,128], index: 2, kind: input, shape index: {}]
  %s3 = inlined_call_operand.vmem [shape: f32[1,128], index: 3, kind: input, shape index: {}]
  %s4 = inlined_call_operand.hbm [shape: bf16[2,32,256], index: 4, kind: output, shape index: {}]
  %s5 = sld [smem:[#allocation0]]
  $region57: #{tpu_custom_call.1} parent=0
    _
  %s7 = ssub.s32 1, %s5
  %s8 = scalar_select 0, %s7, %s5
  $region1: #{tpu_custom_call.1} parent=0
    #allocation3 [shape = 'u8[32768]{0}', space=vmem, size = 0x8000, scoped, tag = 'output window, operand 0']
    #allocation4 [shape = 's32[2]{0}', space=sflag, size = 0x8, scoped, tag = 'scoped memory for tpu_custom_call.1']
    %9 = vsyncpa [#allocation4], 0
    %s10 = scalar_lea.sflag [#allocation4], 1
    %11 = vsyncpa %s10, 0
    loop: start=0, step=1, limit=4
    $region2: #{tpu_custom_call.1} parent=1 // loop_pre_header
      _
    $region3: #{tpu_custom_call.1} parent=1 // loop_header
      %s13 = sphi 0, %s17
      %p14 = scmp.ge.s32.totalorder %s13, 4
      %s20 = sphi 0, %s32
      %s21 = sphi 0, %s28
      %s22 = sphi 0, %s20
      %s23 = sphi 0, %s21
      %s24 = sphi 0, %s22
      %s25 = sphi 0, %s23
      %s37 = sphi 0, %s39
      %s40 = sphi 0, %s37
      %s41 = sphi 0, %s40
      %s57 = sphi 0, %s41
      %s73 = sphi 0, %s75
      %s76 = sphi 0, %s73
      %s77 = sphi 0, %s76
      %s93 = sphi 0, %s77
      %s97 = sphi 0, %s97
      %s99 = sphi 0, %s97
      %s100 = sphi 0, %s99
      %s114 = sphi 0, %s100
      %s118 = sphi 0, %s118
      %s120 = sphi 0, %s118
      %s121 = sphi 0, %s120
      %s135 = sphi 0, %s121
      %s143 = sphi 0, %s145
      %s146 = sphi 0, %s143
      %s147 = sphi 0, %s146
      %s163 = sphi 0, %s147
    $region4: #{tpu_custom_call.1} parent=1 // loop_header_branch
      %16 = sbr.rel (%p14) target = $region8
    $region5: #{tpu_custom_call.1} parent=1 // loop_body
      %s18 = ssub.s32 %s13, 1
      %s19 = ssub.s32 %s13, 2
      %s26 = sadd.s32 1, %s21
      %p27 = scmp.ge.s32.totalorder %s26, 1
      %s28 = scalar_select %p27, 0, %s26
      %s29 = sadd.s32 1, %s20
      %s30 = scalar_select %p27, %s29, %s20
      %p31 = scmp.ge.s32.totalorder %s30, 2
      %s32 = scalar_select %p31, 0, %s30
      %s33 = ssub.s32 %s20, %s32
      %s34 = ssub.s32 %s21, %s28
      %s35 = sor.u32 %s33, %s34
      %p36 = scmp.eq.s32.totalorder %s35, 0
      %s38 = sadd.s32 %s37, 1
      %s39 = scalar_select %p36, %s37, %s38
      %p42 = pneg %p36
      %p43 = scmp.eq.s32.totalorder %s13, 1
      %p44 = por %p42, %p43
      %p45 = scmp.ne.s32.totalorder %s37, %s40
      %p46 = scmp.eq.s32.totalorder %s13, 0
      %p47 = por %p45, %p46
      %p48 = scmp.ne.s32.totalorder %s37, %s40
      %p49 = scmp.eq.s32.totalorder %s18, 1
      %p50 = por %p48, %p49
      %p51 = scmp.ne.s32.totalorder %s40, %s41
      %p52 = scmp.eq.s32.totalorder %s18, 0
      %p53 = por %p51, %p52
      %p54 = scmp.ne.s32.totalorder %s40, %s41
      %p55 = scmp.eq.s32.totalorder %s19, 1
      %p56 = por %p54, %p55
      %p58 = scmp.ne.s32.totalorder %s41, %s57
      %p59 = scmp.eq.s32.totalorder %s19, 0
      %p60 = por %p58, %p59
      %s61 = smul.u32 %s21, 2
      %s62 = ssub.s32 %s61, 1
      %p63 = scmp.gt.s32.totalorder %s62, 0
      %s64 = scalar_select %p63, %s62, 0
      %s65 = smul.u32 %s28, 2
      %s66 = ssub.s32 %s65, 1
      %p67 = scmp.gt.s32.totalorder %s66, 0
      %s68 = scalar_select %p67, %s66, 0
      %s69 = ssub.s32 %s20, %s32
      %s70 = ssub.s32 %s64, %s68
      %s71 = sor.u32 %s69, %s70
      %p72 = scmp.eq.s32.totalorder %s71, 0
      %s74 = sadd.s32 %s73, 1
      %s75 = scalar_select %p72, %s73, %s74
      %p78 = pneg %p72
      %p79 = scmp.eq.s32.totalorder %s13, 1
      %p80 = por %p78, %p79
      %p81 = scmp.ne.s32.totalorder %s73, %s76
      %p82 = scmp.eq.s32.totalorder %s13, 0
      %p83 = por %p81, %p82
      %p84 = scmp.ne.s32.totalorder %s73, %s76
      %p85 = scmp.eq.s32.totalorder %s18, 1
      %p86 = por %p84, %p85
      %p87 = scmp.ne.s32.totalorder %s76, %s77
      %p88 = scmp.eq.s32.totalorder %s18, 0
      %p89 = por %p87, %p88
      %p90 = scmp.ne.s32.totalorder %s76, %s77
      %p91 = scmp.eq.s32.totalorder %s19, 1
      %p92 = por %p90, %p91
      %p94 = scmp.ne.s32.totalorder %s77, %s93
      %p95 = scmp.eq.s32.totalorder %s19, 0
      %p96 = por %p94, %p95
      %s98 = sadd.s32 %s97, 1
      %p101 = scmp.eq.s32.totalorder %s13, 1
      %p102 = scmp.ne.s32.totalorder %s97, %s99
      %p103 = scmp.eq.s32.totalorder %s13, 0
      %p104 = por %p102, %p103
      %p105 = scmp.ne.s32.totalorder %s97, %s99
      %p106 = scmp.eq.s32.totalorder %s18, 1
      %p107 = por %p105, %p106
      %p108 = scmp.ne.s32.totalorder %s99, %s100
      %p109 = scmp.eq.s32.totalorder %s18, 0
      %p110 = por %p108, %p109
      %p111 = scmp.ne.s32.totalorder %s99, %s100
      %p112 = scmp.eq.s32.totalorder %s19, 1
      %p113 = por %p111, %p112
      %p115 = scmp.ne.s32.totalorder %s100, %s114
      %p116 = scmp.eq.s32.totalorder %s19, 0
      %p117 = por %p115, %p116
      %s119 = sadd.s32 %s118, 1
      %p122 = scmp.eq.s32.totalorder %s13, 1
      %p123 = scmp.ne.s32.totalorder %s118, %s120
      %p124 = scmp.eq.s32.totalorder %s13, 0
      %p125 = por %p123, %p124
      %p126 = scmp.ne.s32.totalorder %s118, %s120
      %p127 = scmp.eq.s32.totalorder %s18, 1
      %p128 = por %p126, %p127
      %p129 = scmp.ne.s32.totalorder %s120, %s121
      %p130 = scmp.eq.s32.totalorder %s18, 0
      %p131 = por %p129, %p130
      %p132 = scmp.ne.s32.totalorder %s120, %s121
      %p133 = scmp.eq.s32.totalorder %s19, 1
      %p134 = por %p132, %p133
      %p136 = scmp.ne.s32.totalorder %s121, %s135
      %p137 = scmp.eq.s32.totalorder %s19, 0
      %p138 = por %p136, %p137
      %s139 = ssub.s32 %s20, %s32
      %s140 = ssub.s32 %s21, %s28
      %s141 = sor.u32 %s139, %s140
      %p142 = scmp.eq.s32.totalorder %s141, 0
      %s144 = sadd.s32 %s143, 1
      %s145 = scalar_select %p142, %s143, %s144
      %p148 = pneg %p142
      %p149 = scmp.eq.s32.totalorder %s13, 1
      %p150 = por %p148, %p149
      %p151 = scmp.ne.s32.totalorder %s143, %s146
      %p152 = scmp.eq.s32.totalorder %s13, 0
      %p153 = por %p151, %p152
      %p154 = scmp.ne.s32.totalorder %s143, %s146
      %p155 = scmp.eq.s32.totalorder %s18, 1
      %p156 = por %p154, %p155
      %p157 = scmp.ne.s32.totalorder %s146, %s147
      %p158 = scmp.eq.s32.totalorder %s18, 0
      %p159 = por %p157, %p158
      %p160 = scmp.ne.s32.totalorder %s146, %s147
      %p161 = scmp.eq.s32.totalorder %s19, 1
      %p162 = por %p160, %p161
      %p164 = scmp.ne.s32.totalorder %s147, %s163
      %p165 = scmp.eq.s32.totalorder %s19, 0
      %p166 = por %p164, %p165
      %p167 = scmp.le.s32.totalorder 1, %s13
      %p168 = scmp.lt.s32.totalorder %s13, 3
      %p169 = pnand %p167, %p168
      %p170 = pneg %p169
      // Predicated region
      $region9: #{tpu_custom_call.1} parent=5 // pred_check
        _
      $region10: #{tpu_custom_call.1} parent=5 // pred_check_branch
        %172 = sbr.rel (%p169) target = $region12
      $region11: #{tpu_custom_call.1} parent=5 // pred_region
        %s173 = ssub.s32 %s13, 1
        // Predicated region
        $region13: #{tpu_custom_call.1} parent=11 // pred_check
          %p174 = pneg %p110
        $region14: #{tpu_custom_call.1} parent=11 // pred_check_branch
          %176 = sbr.rel (%p174) target = $region16
        $region15: #{tpu_custom_call.1} parent=11 // pred_region
          _
        $region16: #{tpu_custom_call.1} parent=11 // pred_fallthru
          _
        // Predicated region
        $region17: #{tpu_custom_call.1} parent=11 // pred_check
          %p177 = pneg %p131
        $region18: #{tpu_custom_call.1} parent=11 // pred_check_branch
          %179 = sbr.rel (%p177) target = $region20
        $region19: #{tpu_custom_call.1} parent=11 // pred_region
          _
        $region20: #{tpu_custom_call.1} parent=11 // pred_fallthru
          _
      $region12: #{tpu_custom_call.1} parent=5 // pred_fallthru
        _
      %p180 = scmp.lt.s32.totalorder %s13, 2
      // Predicated region
      $region21: #{tpu_custom_call.1} parent=5 // pred_check
        %p181 = pneg %p180
      $region22: #{tpu_custom_call.1} parent=5 // pred_check_branch
        %183 = sbr.rel (%p181) target = $region24
      $region23: #{tpu_custom_call.1} parent=5 // pred_region
        // Predicated region
        $region25: #{tpu_custom_call.1} parent=23 // pred_check
          %p184 = pneg %p47
        $region26: #{tpu_custom_call.1} parent=23 // pred_check_branch
          %186 = sbr.rel (%p184) target = $region28
        $region27: #{tpu_custom_call.1} parent=23 // pred_region
          %s187 = smul.u32 4, %s21
          %p188 = scmp.lt.s32.totalorder %s20, 1
          %s189 = scalar_select %p188, %s20, 1
          %p190 = scmp.lt.s32.totalorder %s187, 3
          %s191 = scalar_select %p190, %s187, 3
          %s192 = smul.addr %s189, 4
          %s193 = sadd.s32 %s191, %s192
          %s194 = smul.addr %s193, 4
          %s195 = scalar_lea.vmem %s0, %s194
          %s196 = smul.u32 4, %s21
        $region28: #{tpu_custom_call.1} parent=23 // pred_fallthru
          _
        // Predicated region
        $region29: #{tpu_custom_call.1} parent=23 // pred_check
          %p197 = pneg %p83
        $region30: #{tpu_custom_call.1} parent=23 // pred_check_branch
          %199 = sbr.rel (%p197) target = $region32
        $region31: #{tpu_custom_call.1} parent=23 // pred_region
          %s200 = smul.u32 %s21, 2
          %s201 = ssub.s32 %s200, 1
          %p202 = scmp.gt.s32.totalorder %s201, 0
          %s203 = scalar_select %p202, %s201, 0
          %s204 = smul.u32 2, %s203
          %p205 = scmp.lt.s32.totalorder %s20, 1
          %s206 = scalar_select %p205, %s20, 1
          %p207 = scmp.lt.s32.totalorder %s204, 3
          %s208 = scalar_select %p207, %s204, 3
          %s209 = smul.addr %s206, 4
          %s210 = sadd.s32 %s208, %s209
          %s211 = smul.addr %s210, 4
          %s212 = scalar_lea.vmem %s1, %s211
          %s213 = smul.u32 %s21, 2
          %s214 = ssub.s32 %s213, 1
          %p215 = scmp.gt.s32.totalorder %s214, 0
          %s216 = scalar_select %p215, %s214, 0
          %s217 = smul.u32 2, %s216
        $region32: #{tpu_custom_call.1} parent=23 // pred_fallthru
          _
      $region24: #{tpu_custom_call.1} parent=5 // pred_fallthru
        _
      %p218 = scmp.le.s32.totalorder 1, %s13
      %p219 = scmp.lt.s32.totalorder %s13, 3
      %p220 = pnand %p218, %p219
      %p221 = pneg %p220
      // Predicated region
      $region33: #{tpu_custom_call.1} parent=5 // pred_check
        _
      $region34: #{tpu_custom_call.1} parent=5 // pred_check_branch
        %223 = sbr.rel (%p220) target = $region36
      $region35: #{tpu_custom_call.1} parent=5 // pred_region
        %s224 = ssub.s32 %s13, 1
        %s225 = smul.u32 4, %s23
        %p226 = scmp.lt.s32.totalorder %s22, 1
        %s227 = scalar_select %p226, %s22, 1
        %p228 = scmp.lt.s32.totalorder %s225, 3
        %s229 = scalar_select %p228, %s225, 3
        %s230 = smul.addr %s227, 4
        %s231 = sadd.s32 %s229, %s230
        %s232 = smul.addr %s231, 4
        %s233 = scalar_lea.vmem %s0, %s232
        %p234 = pneg %p53
        %p235 = pneg %p50
        %s236 = smul.u32 %s23, 2
        %s237 = ssub.s32 %s236, 1
        %p238 = scmp.gt.s32.totalorder %s237, 0
        %s239 = scalar_select %p238, %s237, 0
        %s240 = smul.u32 2, %s239
        %p241 = scmp.lt.s32.totalorder %s22, 1
        %s242 = scalar_select %p241, %s22, 1
        %p243 = scmp.lt.s32.totalorder %s240, 3
        %s244 = scalar_select %p243, %s240, 3
        %s245 = smul.addr %s242, 4
        %s246 = sadd.s32 %s244, %s245
        %s247 = smul.addr %s246, 4
        %s248 = scalar_lea.vmem %s1, %s247
        %p249 = pneg %p89
        %p250 = pneg %p86
        %p251 = pneg %p110
        %p252 = pneg %p107
        %p253 = pneg %p131
        %p254 = pneg %p128
        %p255 = pneg %p159
        %p256 = pneg %p156
        %s257 = sand.u32 %s146, 1
        %s258 = scalar_lea.sflag [#allocation4], %s257
        %s259 = sand.u32 %s146, 1
        %s260 = smul.addr %s259, 32
        %s261 = scalar_lea.vmem [#allocation3], %s260
        %s262 = smul.u32 4, %s23
        %p263 = scmp.lt.s32.totalorder %s22, 1
        %s264 = scalar_select %p263, %s22, 1
        %p265 = scmp.lt.s32.totalorder %s262, 3
        %s266 = scalar_select %p265, %s262, 3
        %s267 = smul.addr %s264, 4
        %s268 = sadd.s32 %s266, %s267
        %s269 = smul.addr %s268, 4
        %s270 = scalar_lea.vmem %s0, %s269
        %s271 = smul.u32 4, %s23
        %s272 = smul.u32 %s23, 2
        %s273 = ssub.s32 %s272, 1
        %p274 = scmp.gt.s32.totalorder %s273, 0
        %s275 = scalar_select %p274, %s273, 0
        %s276 = smul.u32 2, %s275
        %p277 = scmp.lt.s32.totalorder %s22, 1
        %s278 = scalar_select %p277, %s22, 1
        %p279 = scmp.lt.s32.totalorder %s276, 3
        %s280 = scalar_select %p279, %s276, 3
        %s281 = smul.addr %s278, 4
        %s282 = sadd.s32 %s280, %s281
        %s283 = smul.addr %s282, 4
        %s284 = scalar_lea.vmem %s1, %s283
        %s285 = smul.u32 %s23, 2
        %s286 = ssub.s32 %s285, 1
        %p287 = scmp.gt.s32.totalorder %s286, 0
        %s288 = scalar_select %p287, %s286, 0
        %s289 = smul.u32 2, %s288
        %s290 = smul.u32 4, %s23
        %v292 = vld [vmem:[%s3] sm:$0x1]
        %v293 = vld [vmem:[%s2] sm:$0xf]
        %v294 = vld [vmem:[%s270] sm:$0xf]
        %v295 = vld [vmem:[%s270 + $0x4] sm:$0xf]
        %v296 = vld [vmem:[%s270 + $0x8] sm:$0xf]
        %v297 = vld [vmem:[%s270 + $0xc] sm:$0xf]
        %v302 = vunpack.c.l.b16 %v294
        %v303 = vunpack.c.l.b16 %v295
        %v304 = vunpack.c.l.b16 %v296
        %v305 = vunpack.c.l.b16 %v297
        %v306 = vpack.c.b16 %v303, %v302
        %v307 = vpack.c.b16 %v305, %v304
        %vm308 = vcmask 64512
        %v310 = vsel %vm308, %v306, 0
        %v313 = vsel %vm308, %v307, 0
        %vm315 = vcmask 1043456
        %v317 = vsel %vm315, %v293, 0
        %319 = vmatprep.subr.bf16.mxu0 0
        %320 = vmatpush1.bf16.msra.mxu0 0
        %321 = vmatprep.subr.bf16.mxu0 0
        %322 = vmatpush1.bf16.msra.mxu0 0
        %323 = vmatprep.subr.bf16.mxu0 0
        %324 = vmatpush1.bf16.msra.mxu0 0
        %325 = vmatprep.subr.bf16.mxu0 0
        %326 = vmatpush1.bf16.msra.mxu0 0
        %327 = vmatprep.subr.bf16.mxu0 0
        %328 = vmatpush1.bf16.msra.mxu0 0
        %329 = vmatprep.subr.bf16.mxu0 0
        %330 = vmatpush1.bf16.msra.mxu0 0
        %331 = vmatprep.subr.bf16.mxu0 0
        %332 = vmatpush1.bf16.msra.mxu0 0
        %333 = vmatprep.subr.bf16.mxu0 0
        %334 = vmatpush1.bf16.msra.mxu0 %v317
        %335 = vmatprep.subr.bf16.mxu0 0
        %336 = vmatpush2.bf16.msra.mxu0 0
        %337 = vmatprep.subr.bf16.mxu0 0
        %338 = vmatpush2.bf16.msra.mxu0 0
        %339 = vmatprep.subr.bf16.mxu0 0
        %340 = vmatpush2.bf16.msra.mxu0 0
        %341 = vmatprep.subr.bf16.mxu0 0
        %342 = vmatpush2.bf16.msra.mxu0 0
        %343 = vmatprep.subr.bf16.mxu0 0
        %344 = vmatpush2.bf16.msra.mxu0 0
        %345 = vmatprep.subr.bf16.mxu0 0
        %346 = vmatpush2.bf16.msra.mxu0 0
        %347 = vmatprep.subr.bf16.mxu0 0
        %348 = vmatpush2.bf16.msra.mxu0 0
        %349 = vmatprep.subr.bf16.mxu0 0
        %350 = vmatpush2.bf16.msra.mxu0 0
        %351 = vmatprep.mubr.bf16.mxu0 0
        %352 = vmatmul.mubr.bf16.gmra.mxu0 %v310
        %v353 = vpop.f32.mrf.mxu0
        %v354 = vadd.f32 0.0, %v353
        %v355 = vpop.f32.mrf.mxu0
        %v356 = vpop.f32.mrf.mxu0
        %v357 = vadd.f32 0.0, %v356
        %v358 = vpop.f32.mrf.mxu0
        %359 = vmatprep.mubr.bf16.mxu0 0
        %360 = vmatmul.mubr.bf16.gmra.mxu0 %v313
        %v361 = vpop.f32.mrf.mxu0
        %v362 = vadd.f32 0.0, %v361
        %v363 = vpop.f32.mrf.mxu0
        %v364 = vpop.f32.mrf.mxu0
        %v365 = vadd.f32 0.0, %v364
        %v366 = vpop.f32.mrf.mxu0
        %367 = vdwg.mxu0
        %v369 = vlaneseq
        %v370 = vshrl.u32 %v369, 7
        %v371 = vsub.s32 0, %v370
        %v372 = vrot.slane %v292, %v371
        %v374 = vadd.f32 %v372, %v354
        %v375 = vadd.f32 %v372, %v357
        %v376 = vadd.f32 %v372, %v362
        %v377 = vadd.f32 %v372, %v365
        %378 = vst [vmem:[#allocation2] sm:$0xff] %v374
        %379 = vst [vmem:[#allocation2 + $0x8] sm:$0xff] %v375
        %380 = vst [vmem:[#allocation2 + $0x10] sm:$0xff] %v376
        %381 = vst [vmem:[#allocation2 + $0x18] sm:$0xff] %v377
        %s382 = scalar_lea.vmem %s2, 8
        %v383 = vld [vmem:[%s382] sm:$0xf]
        %v384 = vld [vmem:[%s270] sm:$0xf]
        %v385 = vld [vmem:[%s270 + $0x4] sm:$0xf]
        %v386 = vld [vmem:[%s270 + $0x8] sm:$0xf]
        %v387 = vld [vmem:[%s270 + $0xc] sm:$0xf]
        %v392 = vunpack.c.l.b16 %v384
        %v393 = vunpack.c.l.b16 %v385
        %v394 = vunpack.c.l.b16 %v386
        %v395 = vunpack.c.l.b16 %v387
        %v396 = vpack.c.b16 %v393, %v392
        %v397 = vpack.c.b16 %v395, %v394
        %v399 = vsel %vm308, %v396, 0
        %v402 = vsel %vm308, %v397, 0
        %v405 = vsel %vm315, %v383, 0
        %407 = vmatprep.subr.bf16.mxu0 0
        %408 = vmatpush1.bf16.msra.mxu0 0
        %409 = vmatprep.subr.bf16.mxu0 0
        %410 = vmatpush1.bf16.msra.mxu0 0
        %411 = vmatprep.subr.bf16.mxu0 0
        %412 = vmatpush1.bf16.msra.mxu0 0
        %413 = vmatprep.subr.bf16.mxu0 0
        %414 = vmatpush1.bf16.msra.mxu0 0
        %415 = vmatprep.subr.bf16.mxu0 0
        %416 = vmatpush1.bf16.msra.mxu0 0
        %417 = vmatprep.subr.bf16.mxu0 0
        %418 = vmatpush1.bf16.msra.mxu0 0
        %419 = vmatprep.subr.bf16.mxu0 0
        %420 = vmatpush1.bf16.msra.mxu0 0
        %421 = vmatprep.subr.bf16.mxu0 0
        %422 = vmatpush1.bf16.msra.mxu0 %v405
        %423 = vmatprep.subr.bf16.mxu0 0
        %424 = vmatpush2.bf16.msra.mxu0 0
        %425 = vmatprep.subr.bf16.mxu0 0
        %426 = vmatpush2.bf16.msra.mxu0 0
        %427 = vmatprep.subr.bf16.mxu0 0
        %428 = vmatpush2.bf16.msra.mxu0 0
        %429 = vmatprep.subr.bf16.mxu0 0
        %430 = vmatpush2.bf16.msra.mxu0 0
        %431 = vmatprep.subr.bf16.mxu0 0
        %432 = vmatpush2.bf16.msra.mxu0 0
        %433 = vmatprep.subr.bf16.mxu0 0
        %434 = vmatpush2.bf16.msra.mxu0 0
        %435 = vmatprep.subr.bf16.mxu0 0
        %436 = vmatpush2.bf16.msra.mxu0 0
        %437 = vmatprep.subr.bf16.mxu0 0
        %438 = vmatpush2.bf16.msra.mxu0 0
        %439 = vmatprep.mubr.bf16.mxu0 0
        %440 = vmatmul.mubr.bf16.gmra.mxu0 %v399
        %v441 = vpop.f32.mrf.mxu0
        %v442 = vadd.f32 0.0, %v441
        %v443 = vpop.f32.mrf.mxu0
        %v444 = vpop.f32.mrf.mxu0
        %v445 = vadd.f32 0.0, %v444
        %v446 = vpop.f32.mrf.mxu0
        %447 = vmatprep.mubr.bf16.mxu0 0
        %448 = vmatmul.mubr.bf16.gmra.mxu0 %v402
        %v449 = vpop.f32.mrf.mxu0
        %v450 = vadd.f32 0.0, %v449
        %v451 = vpop.f32.mrf.mxu0
        %v452 = vpop.f32.mrf.mxu0
        %v453 = vadd.f32 0.0, %v452
        %v454 = vpop.f32.mrf.mxu0
        %455 = vdwg.mxu0
        %v456 = vld [vmem:[#allocation2 + $0x1] sm:$0xff]
        %v457 = vld [vmem:[#allocation2 + $0x9] sm:$0xff]
        %v458 = vld [vmem:[#allocation2 + $0x11] sm:$0xff]
        %v459 = vld [vmem:[#allocation2 + $0x19] sm:$0x7f]
        %v460 = vadd.f32 %v456, %v442
        %v461 = vadd.f32 %v457, %v445
        %v462 = vadd.f32 %v458, %v450
        %v463 = vadd.f32 %v459, %v453
        %464 = vst [vmem:[#allocation2 + $0x1] sm:$0xff] %v460
        %465 = vst [vmem:[#allocation2 + $0x9] sm:$0xff] %v461
        %466 = vst [vmem:[#allocation2 + $0x11] sm:$0xff] %v462
        %467 = vst [vmem:[#allocation2 + $0x19] sm:$0x7f] %v463
        %p468 = scmp.gt.s32.totalorder %s23, 0
        // Predicated region
        $region37: #{tpu_custom_call.1} parent=35 // pred_check
          %p469 = pneg %p468
        $region38: #{tpu_custom_call.1} parent=35 // pred_check_branch
          %471 = sbr.rel (%p469) target = $region40
        $region39: #{tpu_custom_call.1} parent=35 // pred_region
          %v472 = vld [vmem:[%s284 + $0x4] sm:$0x8]
          %v474 = vunpack.c.l.b16 %v472
          %v475 = vpack.c.b16 %v474, %v474
          %v477 = vshrl.u32 %v475, 16
          %v479 = vrot.slane %v477, 3
          %v481 = vsel %vm308, %v479, 0
          %483 = vmatprep.subr.bf16.mxu0 0
          %484 = vmatpush1.bf16.msra.mxu0 0
          %485 = vmatprep.subr.bf16.mxu0 0
          %486 = vmatpush1.bf16.msra.mxu0 0
          %487 = vmatprep.subr.bf16.mxu0 0
          %488 = vmatpush1.bf16.msra.mxu0 0
          %489 = vmatprep.subr.bf16.mxu0 0
          %490 = vmatpush1.bf16.msra.mxu0 0
          %491 = vmatprep.subr.bf16.mxu0 0
          %492 = vmatpush1.bf16.msra.mxu0 0
          %493 = vmatprep.subr.bf16.mxu0 0
          %494 = vmatpush1.bf16.msra.mxu0 0
          %495 = vmatprep.subr.bf16.mxu0 0
          %496 = vmatpush1.bf16.msra.mxu0 0
          %497 = vmatprep.subr.bf16.mxu0 0
          %498 = vmatpush1.bf16.msra.mxu0 %v405
          %499 = vmatprep.subr.bf16.mxu0 0
          %500 = vmatpush2.bf16.msra.mxu0 0
          %501 = vmatprep.subr.bf16.mxu0 0
          %502 = vmatpush2.bf16.msra.mxu0 0
          %503 = vmatprep.subr.bf16.mxu0 0
          %504 = vmatpush2.bf16.msra.mxu0 0
          %505 = vmatprep.subr.bf16.mxu0 0
          %506 = vmatpush2.bf16.msra.mxu0 0
          %507 = vmatprep.subr.bf16.mxu0 0
          %508 = vmatpush2.bf16.msra.mxu0 0
          %509 = vmatprep.subr.bf16.mxu0 0
          %510 = vmatpush2.bf16.msra.mxu0 0
          %511 = vmatprep.subr.bf16.mxu0 0
          %512 = vmatpush2.bf16.msra.mxu0 0
          %513 = vmatprep.subr.bf16.mxu0 0
          %514 = vmatpush2.bf16.msra.mxu0 0
          %515 = vmatprep.mubr.bf16.mxu0 0
          %516 = vmatmul.mubr.bf16.gmra.mxu0 %v481
          %v517 = vpop.f32.mrf.mxu0
          %v518 = vadd.f32 0.0, %v517
          %v519 = vpop.f32.mrf.mxu0
          %v520 = vpop.f32.mrf.mxu0
          %v521 = vpop.f32.mrf.mxu0
          %522 = vdwg.mxu0
          %v523 = vld [vmem:[#allocation2] sm:$0x1]
          %v524 = vadd.f32 %v523, %v518
          %525 = vst [vmem:[#allocation2] sm:$0x1] %v524
        $region40: #{tpu_custom_call.1} parent=35 // pred_fallthru
          _
        %v526 = vld [vmem:[#allocation2] sm:$0xff]
        %v527 = vld [vmem:[#allocation2 + $0x8] sm:$0xff]
        %v528 = vld [vmem:[#allocation2 + $0x10] sm:$0xff]
        %v529 = vld [vmem:[#allocation2 + $0x18] sm:$0xff]
        %v530 = vpack.c.bf16 %v527, %v526
        %v531 = vpack.c.bf16 %v529, %v528
        %v534 = vunpack.c.l.b16 %v530
        %v535 = vunpack.c.h.b16 %v530
        %v536 = vunpack.c.l.b16 %v531
        %v537 = vunpack.c.h.b16 %v531
        %v538 = vpack.c.b16 %v534, %v534
        %v539 = vpack.c.b16 %v535, %v535
        %v540 = vpack.c.b16 %v536, %v536
        %v541 = vpack.c.b16 %v537, %v537
        %546 = vst [vmem:[%s261] sm:$0xf] %v538
        %547 = vst [vmem:[%s261 + $0x8] sm:$0xf] %v539
        %548 = vst [vmem:[%s261 + $0x10] sm:$0xf] %v540
        %549 = vst [vmem:[%s261 + $0x18] sm:$0xf] %v541
        %s550 = scalar_lea.vmem %s2, 4
        %v551 = vld [vmem:[%s550] sm:$0xf]
        %v552 = vld [vmem:[%s270] sm:$0xf]
        %v553 = vld [vmem:[%s270 + $0x4] sm:$0xf]
        %v554 = vld [vmem:[%s270 + $0x8] sm:$0xf]
        %v555 = vld [vmem:[%s270 + $0xc] sm:$0xf]
        %v560 = vunpack.c.l.b16 %v552
        %v561 = vunpack.c.l.b16 %v553
        %v562 = vunpack.c.l.b16 %v554
        %v563 = vunpack.c.l.b16 %v555
        %v564 = vpack.c.b16 %v561, %v560
        %v565 = vpack.c.b16 %v563, %v562
        %v567 = vsel %vm308, %v564, 0
        %v570 = vsel %vm308, %v565, 0
        %v573 = vsel %vm315, %v551, 0
        %575 = vmatprep.subr.bf16.mxu0 0
        %576 = vmatpush1.bf16.msra.mxu0 0
        %577 = vmatprep.subr.bf16.mxu0 0
        %578 = vmatpush1.bf16.msra.mxu0 0
        %579 = vmatprep.subr.bf16.mxu0 0
        %580 = vmatpush1.bf16.msra.mxu0 0
        %581 = vmatprep.subr.bf16.mxu0 0
        %582 = vmatpush1.bf16.msra.mxu0 0
        %583 = vmatprep.subr.bf16.mxu0 0
        %584 = vmatpush1.bf16.msra.mxu0 0
        %585 = vmatprep.subr.bf16.mxu0 0
        %586 = vmatpush1.bf16.msra.mxu0 0
        %587 = vmatprep.subr.bf16.mxu0 0
        %588 = vmatpush1.bf16.msra.mxu0 0
        %589 = vmatprep.subr.bf16.mxu0 0
        %590 = vmatpush1.bf16.msra.mxu0 %v573
        %591 = vmatprep.subr.bf16.mxu0 0
        %592 = vmatpush2.bf16.msra.mxu0 0
        %593 = vmatprep.subr.bf16.mxu0 0
        %594 = vmatpush2.bf16.msra.mxu0 0
        %595 = vmatprep.subr.bf16.mxu0 0
        %596 = vmatpush2.bf16.msra.mxu0 0
        %597 = vmatprep.subr.bf16.mxu0 0
        %598 = vmatpush2.bf16.msra.mxu0 0
        %599 = vmatprep.subr.bf16.mxu0 0
        %600 = vmatpush2.bf16.msra.mxu0 0
        %601 = vmatprep.subr.bf16.mxu0 0
        %602 = vmatpush2.bf16.msra.mxu0 0
        %603 = vmatprep.subr.bf16.mxu0 0
        %604 = vmatpush2.bf16.msra.mxu0 0
        %605 = vmatprep.subr.bf16.mxu0 0
        %606 = vmatpush2.bf16.msra.mxu0 0
        %607 = vmatprep.mubr.bf16.mxu0 0
        %608 = vmatmul.mubr.bf16.gmra.mxu0 %v567
        %v609 = vpop.f32.mrf.mxu0
        %v610 = vadd.f32 0.0, %v609
        %v611 = vpop.f32.mrf.mxu0
        %v612 = vpop.f32.mrf.mxu0
        %v613 = vadd.f32 0.0, %v612
        %v614 = vpop.f32.mrf.mxu0
        %615 = vmatprep.mubr.bf16.mxu0 0
        %616 = vmatmul.mubr.bf16.gmra.mxu0 %v570
        %v617 = vpop.f32.mrf.mxu0
        %v618 = vadd.f32 0.0, %v617
        %v619 = vpop.f32.mrf.mxu0
        %v620 = vpop.f32.mrf.mxu0
        %v621 = vadd.f32 0.0, %v620
        %v622 = vpop.f32.mrf.mxu0
        %623 = vdwg.mxu0
        %v624 = vadd.f32 %v372, %v610
        %v625 = vadd.f32 %v372, %v613
        %v626 = vadd.f32 %v372, %v618
        %v627 = vadd.f32 %v372, %v621
        %628 = vst [vmem:[#allocation2] sm:$0xff] %v624
        %629 = vst [vmem:[#allocation2 + $0x8] sm:$0xff] %v625
        %630 = vst [vmem:[#allocation2 + $0x10] sm:$0xff] %v626
        %631 = vst [vmem:[#allocation2 + $0x18] sm:$0xff] %v627
        %s632 = scalar_lea.vmem %s2, 12
        %v633 = vld [vmem:[%s632] sm:$0xf]
        %v634 = vld [vmem:[%s270] sm:$0xf]
        %v635 = vld [vmem:[%s270 + $0x4] sm:$0xf]
        %v636 = vld [vmem:[%s270 + $0x8] sm:$0xf]
        %v637 = vld [vmem:[%s270 + $0xc] sm:$0xf]
        %v642 = vunpack.c.l.b16 %v634
        %v643 = vunpack.c.l.b16 %v635
        %v644 = vunpack.c.l.b16 %v636
        %v645 = vunpack.c.l.b16 %v637
        %v646 = vpack.c.b16 %v643, %v642
        %v647 = vpack.c.b16 %v645, %v644
        %v649 = vsel %vm308, %v646, 0
        %v652 = vsel %vm308, %v647, 0
        %v655 = vsel %vm315, %v633, 0
        %657 = vmatprep.subr.bf16.mxu0 0
        %658 = vmatpush1.bf16.msra.mxu0 0
        %659 = vmatprep.subr.bf16.mxu0 0
        %660 = vmatpush1.bf16.msra.mxu0 0
        %661 = vmatprep.subr.bf16.mxu0 0
        %662 = vmatpush1.bf16.msra.mxu0 0
        %663 = vmatprep.subr.bf16.mxu0 0
        %664 = vmatpush1.bf16.msra.mxu0 0
        %665 = vmatprep.subr.bf16.mxu0 0
        %666 = vmatpush1.bf16.msra.mxu0 0
        %667 = vmatprep.subr.bf16.mxu0 0
        %668 = vmatpush1.bf16.msra.mxu0 0
        %669 = vmatprep.subr.bf16.mxu0 0
        %670 = vmatpush1.bf16.msra.mxu0 0
        %671 = vmatprep.subr.bf16.mxu0 0
        %672 = vmatpush1.bf16.msra.mxu0 %v655
        %673 = vmatprep.subr.bf16.mxu0 0
        %674 = vmatpush2.bf16.msra.mxu0 0
        %675 = vmatprep.subr.bf16.mxu0 0
        %676 = vmatpush2.bf16.msra.mxu0 0
        %677 = vmatprep.subr.bf16.mxu0 0
        %678 = vmatpush2.bf16.msra.mxu0 0
        %679 = vmatprep.subr.bf16.mxu0 0
        %680 = vmatpush2.bf16.msra.mxu0 0
        %681 = vmatprep.subr.bf16.mxu0 0
        %682 = vmatpush2.bf16.msra.mxu0 0
        %683 = vmatprep.subr.bf16.mxu0 0
        %684 = vmatpush2.bf16.msra.mxu0 0
        %685 = vmatprep.subr.bf16.mxu0 0
        %686 = vmatpush2.bf16.msra.mxu0 0
        %687 = vmatprep.subr.bf16.mxu0 0
        %688 = vmatpush2.bf16.msra.mxu0 0
        %689 = vmatprep.mubr.bf16.mxu0 0
        %690 = vmatmul.mubr.bf16.gmra.mxu0 %v649
        %v691 = vpop.f32.mrf.mxu0
        %v692 = vadd.f32 0.0, %v691
        %v693 = vpop.f32.mrf.mxu0
        %v694 = vpop.f32.mrf.mxu0
        %v695 = vadd.f32 0.0, %v694
        %v696 = vpop.f32.mrf.mxu0
        %697 = vmatprep.mubr.bf16.mxu0 0
        %698 = vmatmul.mubr.bf16.gmra.mxu0 %v652
        %v699 = vpop.f32.mrf.mxu0
        %v700 = vadd.f32 0.0, %v699
        %v701 = vpop.f32.mrf.mxu0
        %v702 = vpop.f32.mrf.mxu0
        %v703 = vadd.f32 0.0, %v702
        %v704 = vpop.f32.mrf.mxu0
        %705 = vdwg.mxu0
        %v706 = vld [vmem:[#allocation2 + $0x1] sm:$0xff]
        %v707 = vld [vmem:[#allocation2 + $0x9] sm:$0xff]
        %v708 = vld [vmem:[#allocation2 + $0x11] sm:$0xff]
        %v709 = vld [vmem:[#allocation2 + $0x19] sm:$0x7f]
        %v710 = vadd.f32 %v706, %v692
        %v711 = vadd.f32 %v707, %v695
        %v712 = vadd.f32 %v708, %v700
        %v713 = vadd.f32 %v709, %v703
        %714 = vst [vmem:[#allocation2 + $0x1] sm:$0xff] %v710
        %715 = vst [vmem:[#allocation2 + $0x9] sm:$0xff] %v711
        %716 = vst [vmem:[#allocation2 + $0x11] sm:$0xff] %v712
        %717 = vst [vmem:[#allocation2 + $0x19] sm:$0x7f] %v713
        // Predicated region
        $region41: #{tpu_custom_call.1} parent=35 // pred_check
          %p718 = pneg %p468
        $region42: #{tpu_custom_call.1} parent=35 // pred_check_branch
          %720 = sbr.rel (%p718) target = $region44
        $region43: #{tpu_custom_call.1} parent=35 // pred_region
          %v721 = vld [vmem:[%s284 + $0x4] sm:$0x8]
          %v723 = vunpack.c.l.b16 %v721
          %v724 = vpack.c.b16 %v723, %v723
          %v726 = vshrl.u32 %v724, 16
          %v728 = vrot.slane %v726, 3
          %v730 = vsel %vm308, %v728, 0
          %732 = vmatprep.subr.bf16.mxu0 0
          %733 = vmatpush1.bf16.msra.mxu0 0
          %734 = vmatprep.subr.bf16.mxu0 0
          %735 = vmatpush1.bf16.msra.mxu0 0
          %736 = vmatprep.subr.bf16.mxu0 0
          %737 = vmatpush1.bf16.msra.mxu0 0
          %738 = vmatprep.subr.bf16.mxu0 0
          %739 = vmatpush1.bf16.msra.mxu0 0
          %740 = vmatprep.subr.bf16.mxu0 0
          %741 = vmatpush1.bf16.msra.mxu0 0
          %742 = vmatprep.subr.bf16.mxu0 0
          %743 = vmatpush1.bf16.msra.mxu0 0
          %744 = vmatprep.subr.bf16.mxu0 0
          %745 = vmatpush1.bf16.msra.mxu0 0
          %746 = vmatprep.subr.bf16.mxu0 0
          %747 = vmatpush1.bf16.msra.mxu0 %v655
          %748 = vmatprep.subr.bf16.mxu0 0
          %749 = vmatpush2.bf16.msra.mxu0 0
          %750 = vmatprep.subr.bf16.mxu0 0
          %751 = vmatpush2.bf16.msra.mxu0 0
          %752 = vmatprep.subr.bf16.mxu0 0
          %753 = vmatpush2.bf16.msra.mxu0 0
          %754 = vmatprep.subr.bf16.mxu0 0
          %755 = vmatpush2.bf16.msra.mxu0 0
          %756 = vmatprep.subr.bf16.mxu0 0
          %757 = vmatpush2.bf16.msra.mxu0 0
          %758 = vmatprep.subr.bf16.mxu0 0
          %759 = vmatpush2.bf16.msra.mxu0 0
          %760 = vmatprep.subr.bf16.mxu0 0
          %761 = vmatpush2.bf16.msra.mxu0 0
          %762 = vmatprep.subr.bf16.mxu0 0
          %763 = vmatpush2.bf16.msra.mxu0 0
          %764 = vmatprep.mubr.bf16.mxu0 0
          %765 = vmatmul.mubr.bf16.gmra.mxu0 %v730
          %v766 = vpop.f32.mrf.mxu0
          %v767 = vadd.f32 0.0, %v766
          %v768 = vpop.f32.mrf.mxu0
          %v769 = vpop.f32.mrf.mxu0
          %v770 = vpop.f32.mrf.mxu0
          %771 = vdwg.mxu0
          %v772 = vld [vmem:[#allocation2] sm:$0x1]
          %v773 = vadd.f32 %v772, %v767
          %774 = vst [vmem:[#allocation2] sm:$0x1] %v773
        $region44: #{tpu_custom_call.1} parent=35 // pred_fallthru
          _
        %v775 = vld [vmem:[#allocation2] sm:$0xff]
        %v776 = vld [vmem:[#allocation2 + $0x8] sm:$0xff]
        %v777 = vld [vmem:[#allocation2 + $0x10] sm:$0xff]
        %v778 = vld [vmem:[#allocation2 + $0x18] sm:$0xff]
        %v779 = vpack.c.bf16 %v776, %v775
        %v780 = vpack.c.bf16 %v778, %v777
        %v783 = vunpack.c.l.b16 %v779
        %v784 = vunpack.c.h.b16 %v779
        %v785 = vunpack.c.l.b16 %v780
        %v786 = vunpack.c.h.b16 %v780
        %v787 = vpack.c.b16 %v783, %v783
        %v788 = vpack.c.b16 %v784, %v784
        %v789 = vpack.c.b16 %v785, %v785
        %v790 = vpack.c.b16 %v786, %v786
        %795 = vst [vmem:[%s261 + $0x4] sm:$0xf] %v787
        %796 = vst [vmem:[%s261 + $0xc] sm:$0xf] %v788
        %797 = vst [vmem:[%s261 + $0x14] sm:$0xf] %v789
        %798 = vst [vmem:[%s261 + $0x1c] sm:$0xf] %v790
        %s799 = sand.u32 %s146, 1
        %s800 = scalar_lea.sflag [#allocation4], %s799
        %s801 = sand.u32 %s146, 1
        %s802 = smul.addr %s801, 32
        %s803 = scalar_lea.vmem [#allocation3], %s802
        // Predicated region
        $region45: #{tpu_custom_call.1} parent=35 // pred_check
          %p804 = pneg %p156
        $region46: #{tpu_custom_call.1} parent=35 // pred_check_branch
          %806 = sbr.rel (%p804) target = $region48
        $region47: #{tpu_custom_call.1} parent=35 // pred_region
          %s807 = smul.u32 4, %s23
          %s809 = ssub.s32 512, 512
          %810 = vsyncadd %s800, %s809
          %s811 = smul.addr %s807, 2
          %s812 = smul.addr %s22, 8
          %s813 = sadd.s32 %s811, %s812
          %s814 = smul.addr %s813, 64
          %s815 = scalar_lea.hbm %s4, %s814
          %s816 = sshll.u32 %s803, 4
          %s817 = int_to_ptr.vmem [resolvable:$true] %s816
          %822 = dma.vmem_to_hbm [thread:$0]  %s817, 512, %s815, %s800, 128, 128, 8
        $region48: #{tpu_custom_call.1} parent=35 // pred_fallthru
          _
      $region36: #{tpu_custom_call.1} parent=5 // pred_fallthru
        _
      %p823 = scmp.le.s32.totalorder 2, %s13
      // Predicated region
      $region49: #{tpu_custom_call.1} parent=5 // pred_check
        %p824 = pneg %p823
      $region50: #{tpu_custom_call.1} parent=5 // pred_check_branch
        %826 = sbr.rel (%p824) target = $region52
      $region51: #{tpu_custom_call.1} parent=5 // pred_region
        %s827 = ssub.s32 %s13, 2
        // Predicated region
        $region53: #{tpu_custom_call.1} parent=51 // pred_check
          %p828 = pneg %p162
        $region54: #{tpu_custom_call.1} parent=51 // pred_check_branch
          %830 = sbr.rel (%p828) target = $region56
        $region55: #{tpu_custom_call.1} parent=51 // pred_region
          %s831 = sand.u32 %s147, 1
          %s832 = scalar_lea.sflag [#allocation4], %s831
          %s833 = sand.u32 %s147, 1
          %s834 = smul.addr %s833, 32
          %s835 = scalar_lea.vmem [#allocation3], %s834
          %836 = dma.done %s832, 512
        $region56: #{tpu_custom_call.1} parent=51 // pred_fallthru
          _
      $region52: #{tpu_custom_call.1} parent=5 // pred_fallthru
        _
    $region6: #{tpu_custom_call.1} parent=1 // loop_footer
      %s17 = sadd.s32 1, %s13
    $region7: #{tpu_custom_call.1} parent=1 // loop_footer_branch
      %12 = sbr.rel target = $region3
    $region8: #{tpu_custom_call.1} parent=1 // loop_exit
      _
    %837 = vsyncpa [#allocation4], 1
    %s838 = scalar_lea.sflag [#allocation4], 1
    %839 = vsyncpa %s838, 1

</llo_original>
